<compile_context>
chip_gen: v7x
topology: tpu7x:2x2x1
jax: 0.10.0
libtpu: 0.0.40
codegen_flags: <defaults>
</compile_context>

<pallas_src>
import jax
import jax.numpy as jnp
from jax import lax
from jax.experimental import pallas as pl
from jax.experimental.pallas import tpu as pltpu


# ----------------------------------------------------------------------------
# Fused kernel: DMA row gather -> projections -> L2 normalize -> scaled logits
# ----------------------------------------------------------------------------
def _make_clip_kernel(B, S):
    def kernel(idx_ref, lhs_hbm, vp_ref, wt_ref, wv_ref, scale_ref,
               lpt_ref, lpi_ref, te_ref, ie_ref, pooled_ref,
               gather_buf, copy_sems):
        # idx_ref:    [B]      int32 scalar-prefetch (SMEM) -> gather rows
        # lhs_hbm:    [B*S,Dt] last_hidden_state, left in HBM (pl.ANY)
        # vp_ref:     [B, Dv]  pooled vision features          (VMEM resident)
        # wt_ref:     [Dt, P]  text projection (no bias)       (VMEM resident)
        # wv_ref:     [Dv, P]  visual projection (no bias)     (VMEM resident)
        # scale_ref:  [1, 1]   exp(logit_scale)                (SMEM)
        # outputs: lpt [B,B], lpi [B,B], te [B,P], ie [B,P], pooled [B,Dt]
        # scratch: gather_buf [B,Dt] VMEM, copy_sems [B] DMA semaphores

        # 1) Row gather: issue all B DMAs (HBM -> VMEM) back-to-back so their
        #    latency overlaps, then wait. Scalar index reads happen before any
        #    wait (keeps SMEM forwarding intact).
        copies = []
        for b in range(B):
            row = b * S + idx_ref[b]
            cp = pltpu.make_async_copy(
                lhs_hbm.at[pl.ds(row, 1), :],
                gather_buf.at[pl.ds(b, 1), :],
                copy_sems.at[b])
            cp.start()
            copies.append(cp)
        scale = scale_ref[0, 0]          # scalar read before the waits
        for cp in copies:
            cp.wait()

        pooled = gather_buf[...]
        pooled_ref[...] = pooled          # full-tile store of pooled_output

        # 2) Projections on the MXU, f32 accumulation.
        t = jnp.dot(pooled, wt_ref[...], preferred_element_type=jnp.float32)
        v = jnp.dot(vp_ref[...], wv_ref[...], preferred_element_type=jnp.float32)

        # 3) L2 normalize via rsqrt (EUP slot) instead of a VPU divide.
        t = t * lax.rsqrt(jnp.sum(t * t, axis=-1, keepdims=True))
        v = v * lax.rsqrt(jnp.sum(v * v, axis=-1, keepdims=True))

        # 4) Scaled similarity logits; contract last dims on both sides so no
        #    materialized transpose is needed for either orientation.
        dn = (((1,), (1,)), ((), ()))
        lpt_ref[...] = lax.dot_general(
            t, v, dn, preferred_element_type=jnp.float32) * scale
        lpi_ref[...] = lax.dot_general(
            v, t, dn, preferred_element_type=jnp.float32) * scale
        te_ref[...] = t
        ie_ref[...] = v

    return kernel


def clip_fused(argmax_idx, last_hidden_state, vision_pooled, w_text, w_vis,
               exp_logit_scale):
    B, S, Dt = last_hidden_state.shape
    Dv = vision_pooled.shape[-1]
    P = w_text.shape[-1]

    # Flatten to [B*S, Dt] (row-major, free) so each gather is a 2-D row DMA.
    lhs_flat = last_hidden_state.reshape(B * S, Dt)
    scale_2d = jnp.reshape(exp_logit_scale.astype(jnp.float32), (1, 1))

    grid_spec = pltpu.PrefetchScalarGridSpec(
        num_scalar_prefetch=1,           # argmax indices -> SMEM
        grid=(1,),                       # single fused step
        in_specs=[
            pl.BlockSpec(memory_space=pl.ANY),                  # lhs in HBM
            pl.BlockSpec((B, Dv), lambda i, idx: (0, 0)),       # resident
            pl.BlockSpec((Dt, P), lambda i, idx: (0, 0)),       # resident
            pl.BlockSpec((Dv, P), lambda i, idx: (0, 0)),       # resident
            pl.BlockSpec(memory_space=pltpu.MemorySpace.SMEM),  # exp(scale)
        ],
        out_specs=(
            pl.BlockSpec((B, B), lambda i, idx: (0, 0)),    # logits_per_text
            pl.BlockSpec((B, B), lambda i, idx: (0, 0)),    # logits_per_image
            pl.BlockSpec((B, P), lambda i, idx: (0, 0)),    # text_embeds
            pl.BlockSpec((B, P), lambda i, idx: (0, 0)),    # image_embeds
            pl.BlockSpec((B, Dt), lambda i, idx: (0, 0)),   # pooled_output
        ),
        scratch_shapes=[
            pltpu.VMEM((B, Dt), last_hidden_state.dtype),   # gathered rows
            pltpu.SemaphoreType.DMA((B,)),                  # one sem per row
        ],
    )

    return pl.pallas_call(
        _make_clip_kernel(B, S),
        grid_spec=grid_spec,
        out_shape=(
            jax.ShapeDtypeStruct((B, B), jnp.float32),
            jax.ShapeDtypeStruct((B, B), jnp.float32),
            jax.ShapeDtypeStruct((B, P), jnp.float32),
            jax.ShapeDtypeStruct((B, P), jnp.float32),
            jax.ShapeDtypeStruct((B, Dt), last_hidden_state.dtype),
        ),
        compiler_params=pltpu.CompilerParams(
            dimension_semantics=("arbitrary",)),
    )(argmax_idx, lhs_flat, vision_pooled, w_text, w_vis, scale_2d)


# ----------------------------------------------------------------------------
# Wrapper reproducing CLIPPostProcessingWrapper.forward
# ----------------------------------------------------------------------------
def clip_post_processing(params, input_ids, vision_outputs, last_hidden_state,
                         *encoder_outputs):
    # argmax is a tiny [B, S] int reduction needed before the kernel can build
    # the gather addresses; compute it in the wrapper (first-occurrence
    # semantics, matching torch.argmax).
    idx = jnp.argmax(input_ids.astype(jnp.int32), axis=-1).astype(jnp.int32)
    # Hoist exp(logit_scale) out of the kernel hot path.
    exp_scale = jnp.exp(params["logit_scale"].astype(jnp.float32))

    image_pooled = vision_outputs[1]
    (logits_per_text, logits_per_image, text_embeds, image_embeds,
     pooled_output) = clip_fused(
        idx, last_hidden_state, image_pooled,
        params["text_projection"], params["visual_projection"], exp_scale)

    text_outputs = (last_hidden_state, pooled_output) + tuple(encoder_outputs[1:])
    return (logits_per_image, logits_per_text, text_embeds, image_embeds,
            *text_outputs, *vision_outputs)


# ----------------------------------------------------------------------------
# Pure-JAX reference (for correctness check)
# ----------------------------------------------------------------------------
def reference(params, input_ids, vision_outputs, last_hidden_state, *encoder_outputs):
    B = last_hidden_state.shape[0]
    idx = jnp.argmax(input_ids.astype(jnp.int32), axis=-1)
    pooled_output = last_hidden_state[jnp.arange(B), idx]
    image_embeds = vision_outputs[1] @ params["visual_projection"]
    text_embeds = pooled_output @ params["text_projection"]
    image_embeds = image_embeds / jnp.linalg.norm(image_embeds, axis=-1, keepdims=True)
    text_embeds = text_embeds / jnp.linalg.norm(text_embeds, axis=-1, keepdims=True)
    logit_scale = jnp.exp(params["logit_scale"])
    logits_per_text = (text_embeds @ image_embeds.T) * logit_scale
    logits_per_image = logits_per_text.T
    return logits_per_image, logits_per_text, text_embeds, image_embeds, pooled_output


if __name__ == "__main__":
    key = jax.random.PRNGKey(0)
    B, S = 2, 8           # batch, text sequence length
    D_TEXT = 32           # text hidden size
    D_VIS = 32            # vision hidden size
    N_PATCH = 16          # vision sequence length (patches + cls)
    P = 64                # projection dim

    keys = jax.random.split(key, 8)
    input_ids = jax.random.randint(keys[0], (B, S), 0, 1000, dtype=jnp.int32)
    last_hidden_state = jax.random.normal(keys[1], (B, S, D_TEXT), dtype=jnp.float32)
    vision_last_hidden = jax.random.normal(keys[2], (B, N_PATCH, D_VIS), dtype=jnp.float32)
    vision_pooled = jax.random.normal(keys[3], (B, D_VIS), dtype=jnp.float32)
    vision_outputs = (vision_last_hidden, vision_pooled)
    # dummy encoder_outputs (passed through untouched, index 0 is dropped)
    encoder_outputs = (
        jax.random.normal(keys[4], (B, S, D_TEXT), dtype=jnp.float32),
        jax.random.normal(keys[5], (B, S, D_TEXT), dtype=jnp.float32),
    )

    # deterministic synthetic parameters (CLIP projections are bias-free)
    params = {
        "visual_projection": jax.random.normal(keys[6], (D_VIS, P), dtype=jnp.float32) * 0.02,
        "text_projection": jax.random.normal(keys[7], (D_TEXT, P), dtype=jnp.float32) * 0.02,
        "logit_scale": jnp.asarray(jnp.log(1.0 / 0.07), dtype=jnp.float32),
    }

    out = clip_post_processing(params, input_ids, vision_outputs,
                               last_hidden_state, *encoder_outputs)
    out = jax.block_until_ready(out)

    # correctness check against pure-JAX reference
    ref_lpi, ref_lpt, ref_te, ref_ie, ref_pooled = reference(
        params, input_ids, vision_outputs, last_hidden_state, *encoder_outputs)
    logits_per_image, logits_per_text, text_embeds, image_embeds = out[0], out[1], out[2], out[3]
    pooled_output = out[5]
    assert jnp.allclose(logits_per_image, ref_lpi, atol=1e-4, rtol=1e-4)
    assert jnp.allclose(logits_per_text, ref_lpt, atol=1e-4, rtol=1e-4)
    assert jnp.allclose(text_embeds, ref_te, atol=1e-5, rtol=1e-5)
    assert jnp.allclose(image_embeds, ref_ie, atol=1e-5, rtol=1e-5)
    assert jnp.allclose(pooled_output, ref_pooled, atol=1e-6, rtol=1e-6)

    print("KERNEL_OK")
</pallas_src>

<mosaic_0001>
module attributes {stable_mosaic.version = 11 : i64} {
  func.func @kernel(%arg0: i32, %arg1: memref<2xi32, #tpu.memory_space<smem>>, %arg2: memref<16x32xf32, #tpu.memory_space<any>>, %arg3: memref<2x32xf32, #tpu.memory_space<vmem>>, %arg4: memref<32x64xf32, #tpu.memory_space<vmem>>, %arg5: memref<32x64xf32, #tpu.memory_space<vmem>>, %arg6: memref<1x1xf32, #tpu.memory_space<smem>>, %arg7: memref<2x2xf32, #tpu.memory_space<vmem>>, %arg8: memref<2x2xf32, #tpu.memory_space<vmem>>, %arg9: memref<2x64xf32, #tpu.memory_space<vmem>>, %arg10: memref<2x64xf32, #tpu.memory_space<vmem>>, %arg11: memref<2x32xf32, #tpu.memory_space<vmem>>, %arg12: memref<2x32xf32, #tpu.memory_space<vmem>>, %arg13: memref<2x!tpu.dma_semaphore, #tpu.memory_space<semaphore_mem>>) attributes {dimension_semantics = [#tpu.dimension_semantics<arbitrary>], iteration_bounds = array<i64: 1>, scalar_prefetch = 1 : i64, scratch_operands = 2 : i64, tpu.core_type = #tpu.core_type<tc>, window_params = [{}, {pipeline_mode = #tpu.pipeline_mode<synchronous>, transform_indices = @transform_1, window_bounds = array<i64: 2, 32>}, {pipeline_mode = #tpu.pipeline_mode<synchronous>, transform_indices = @transform_2, window_bounds = array<i64: 32, 64>}, {pipeline_mode = #tpu.pipeline_mode<synchronous>, transform_indices = @transform_3, window_bounds = array<i64: 32, 64>}, {transform_indices = @transform_4, window_bounds = array<i64: 1, 1>}, {pipeline_mode = #tpu.pipeline_mode<synchronous>, transform_indices = @transform_5, window_bounds = array<i64: 2, 2>}, {pipeline_mode = #tpu.pipeline_mode<synchronous>, transform_indices = @transform_6, window_bounds = array<i64: 2, 2>}, {pipeline_mode = #tpu.pipeline_mode<synchronous>, transform_indices = @transform_7, window_bounds = array<i64: 2, 64>}, {pipeline_mode = #tpu.pipeline_mode<synchronous>, transform_indices = @transform_8, window_bounds = array<i64: 2, 64>}, {pipeline_mode = #tpu.pipeline_mode<synchronous>, transform_indices = @transform_9, window_bounds = array<i64: 2, 32>}]} {
    %c0 = arith.constant 0 : index
    %0 = memref.load %arg1[%c0] : memref<2xi32, #tpu.memory_space<smem>>
    %c0_i32 = arith.constant 0 : i32
    %1 = arith.addi %c0_i32, %0 : i32
    %c0_i32_0 = arith.constant 0 : i32
    %c0_i32_1 = arith.constant 0 : i32
    %2 = tpu.memref_slice %arg2[%1, %c0_i32_1] : memref<16x32xf32, #tpu.memory_space<any>> -> memref<1x32xf32, #tpu.memory_space<any>>
    %c0_i32_2 = arith.constant 0 : i32
    %c0_i32_3 = arith.constant 0 : i32
    %3 = tpu.memref_slice %arg12[%c0_i32_2, %c0_i32_3] : memref<2x32xf32, #tpu.memory_space<vmem>> -> memref<1x32xf32, #tpu.memory_space<vmem>>
    %4 = tpu.memref_slice %arg13[%c0_i32_0] : memref<2x!tpu.dma_semaphore, #tpu.memory_space<semaphore_mem>> -> memref<1x!tpu.dma_semaphore, #tpu.memory_space<semaphore_mem>>
    %5 = tpu.memref_squeeze %4 : memref<1x!tpu.dma_semaphore, #tpu.memory_space<semaphore_mem>> -> memref<!tpu.dma_semaphore, #tpu.memory_space<semaphore_mem>>
    tpu.enqueue_dma source(%2 : memref<1x32xf32, #tpu.memory_space<any>>) target(%3 : memref<1x32xf32, #tpu.memory_space<vmem>>) target_semaphore(%5 : memref<!tpu.dma_semaphore, #tpu.memory_space<semaphore_mem>>)
    %c1 = arith.constant 1 : index
    %6 = memref.load %arg1[%c1] : memref<2xi32, #tpu.memory_space<smem>>
    %c8_i32 = arith.constant 8 : i32
    %7 = arith.addi %c8_i32, %6 : i32
    %c1_i32 = arith.constant 1 : i32
    %c0_i32_4 = arith.constant 0 : i32
    %8 = tpu.memref_slice %arg2[%7, %c0_i32_4] : memref<16x32xf32, #tpu.memory_space<any>> -> memref<1x32xf32, #tpu.memory_space<any>>
    %c1_i32_5 = arith.constant 1 : i32
    %c0_i32_6 = arith.constant 0 : i32
    %9 = tpu.memref_slice %arg12[%c1_i32_5, %c0_i32_6] : memref<2x32xf32, #tpu.memory_space<vmem>> -> memref<1x32xf32, #tpu.memory_space<vmem>>
    %10 = tpu.memref_slice %arg13[%c1_i32] : memref<2x!tpu.dma_semaphore, #tpu.memory_space<semaphore_mem>> -> memref<1x!tpu.dma_semaphore, #tpu.memory_space<semaphore_mem>>
    %11 = tpu.memref_squeeze %10 : memref<1x!tpu.dma_semaphore, #tpu.memory_space<semaphore_mem>> -> memref<!tpu.dma_semaphore, #tpu.memory_space<semaphore_mem>>
    tpu.enqueue_dma source(%8 : memref<1x32xf32, #tpu.memory_space<any>>) target(%9 : memref<1x32xf32, #tpu.memory_space<vmem>>) target_semaphore(%11 : memref<!tpu.dma_semaphore, #tpu.memory_space<semaphore_mem>>)
    %c0_7 = arith.constant 0 : index
    %c0_8 = arith.constant 0 : index
    %12 = memref.load %arg6[%c0_7, %c0_8] : memref<1x1xf32, #tpu.memory_space<smem>>
    %c0_i32_9 = arith.constant 0 : i32
    %c0_i32_10 = arith.constant 0 : i32
    %13 = tpu.memref_slice %arg2[%1, %c0_i32_10] : memref<16x32xf32, #tpu.memory_space<any>> -> memref<1x32xf32, #tpu.memory_space<any>>
    %c0_i32_11 = arith.constant 0 : i32
    %c0_i32_12 = arith.constant 0 : i32
    %14 = tpu.memref_slice %arg12[%c0_i32_11, %c0_i32_12] : memref<2x32xf32, #tpu.memory_space<vmem>> -> memref<1x32xf32, #tpu.memory_space<vmem>>
    %15 = tpu.memref_slice %arg13[%c0_i32_9] : memref<2x!tpu.dma_semaphore, #tpu.memory_space<semaphore_mem>> -> memref<1x!tpu.dma_semaphore, #tpu.memory_space<semaphore_mem>>
    %16 = tpu.memref_squeeze %15 : memref<1x!tpu.dma_semaphore, #tpu.memory_space<semaphore_mem>> -> memref<!tpu.dma_semaphore, #tpu.memory_space<semaphore_mem>>
    tpu.wait_dma2 semaphore(%16 : memref<!tpu.dma_semaphore, #tpu.memory_space<semaphore_mem>>) src(%13 : memref<1x32xf32, #tpu.memory_space<any>>) dst(%14 : memref<1x32xf32, #tpu.memory_space<vmem>>)
    %c1_i32_13 = arith.constant 1 : i32
    %c0_i32_14 = arith.constant 0 : i32
    %17 = tpu.memref_slice %arg2[%7, %c0_i32_14] : memref<16x32xf32, #tpu.memory_space<any>> -> memref<1x32xf32, #tpu.memory_space<any>>
    %c1_i32_15 = arith.constant 1 : i32
    %c0_i32_16 = arith.constant 0 : i32
    %18 = tpu.memref_slice %arg12[%c1_i32_15, %c0_i32_16] : memref<2x32xf32, #tpu.memory_space<vmem>> -> memref<1x32xf32, #tpu.memory_space<vmem>>
    %19 = tpu.memref_slice %arg13[%c1_i32_13] : memref<2x!tpu.dma_semaphore, #tpu.memory_space<semaphore_mem>> -> memref<1x!tpu.dma_semaphore, #tpu.memory_space<semaphore_mem>>
    %20 = tpu.memref_squeeze %19 : memref<1x!tpu.dma_semaphore, #tpu.memory_space<semaphore_mem>> -> memref<!tpu.dma_semaphore, #tpu.memory_space<semaphore_mem>>
    tpu.wait_dma2 semaphore(%20 : memref<!tpu.dma_semaphore, #tpu.memory_space<semaphore_mem>>) src(%17 : memref<1x32xf32, #tpu.memory_space<any>>) dst(%18 : memref<1x32xf32, #tpu.memory_space<vmem>>)
    %c0_17 = arith.constant 0 : index
    %c0_18 = arith.constant 0 : index
    %21 = vector.load %arg12[%c0_17, %c0_18] : memref<2x32xf32, #tpu.memory_space<vmem>>, vector<2x32xf32>
    %c0_19 = arith.constant 0 : index
    %c0_20 = arith.constant 0 : index
    %22 = vector.load %arg11[%c0_19, %c0_20] : memref<2x32xf32, #tpu.memory_space<vmem>>, vector<2x32xf32>
    tpu.vector_store %arg11[%c0_19, %c0_20], %21 {strides = array<i32>} : memref<2x32xf32, #tpu.memory_space<vmem>>, vector<2x32xf32>,
    %c0_21 = arith.constant 0 : index
    %c0_22 = arith.constant 0 : index
    %23 = vector.load %arg4[%c0_21, %c0_22] : memref<32x64xf32, #tpu.memory_space<vmem>>, vector<32x64xf32>
    %cst = arith.constant dense<0.000000e+00> : vector<2x64xf32>
    %24 = tpu.matmul %21, %23, %cst {dimension_numbers = #tpu.dot_dimension_numbers<[1], [0], [0], [1], [0, 0, 1, 1], [], []>} : vector<2x32xf32>, vector<32x64xf32>, vector<2x64xf32> -> vector<2x64xf32>
    %c0_23 = arith.constant 0 : index
    %c0_24 = arith.constant 0 : index
    %25 = vector.load %arg3[%c0_23, %c0_24] : memref<2x32xf32, #tpu.memory_space<vmem>>, vector<2x32xf32>
    %c0_25 = arith.constant 0 : index
    %c0_26 = arith.constant 0 : index
    %26 = vector.load %arg5[%c0_25, %c0_26] : memref<32x64xf32, #tpu.memory_space<vmem>>, vector<32x64xf32>
    %cst_27 = arith.constant dense<0.000000e+00> : vector<2x64xf32>
    %27 = tpu.matmul %25, %26, %cst_27 {dimension_numbers = #tpu.dot_dimension_numbers<[1], [0], [0], [1], [0, 0, 1, 1], [], []>} : vector<2x32xf32>, vector<32x64xf32>, vector<2x64xf32> -> vector<2x64xf32>
    %28 = arith.mulf %24, %24 : vector<2x64xf32>
    %cst_28 = arith.constant dense<0.000000e+00> : vector<2xf32>
    %29 = vector.multi_reduction <add>, %28, %cst_28 [1] : vector<2x64xf32> to vector<2xf32>
    %30 = vector.shape_cast %29 : vector<2xf32> to vector<2x1xf32>
    %31 = math.rsqrt %30 : vector<2x1xf32>
    %32 = vector.broadcast %31 : vector<2x1xf32> to vector<2x64xf32>
    %33 = arith.mulf %24, %32 : vector<2x64xf32>
    %34 = arith.mulf %27, %27 : vector<2x64xf32>
    %cst_29 = arith.constant dense<0.000000e+00> : vector<2xf32>
    %35 = vector.multi_reduction <add>, %34, %cst_29 [1] : vector<2x64xf32> to vector<2xf32>
    %36 = vector.shape_cast %35 : vector<2xf32> to vector<2x1xf32>
    %37 = math.rsqrt %36 : vector<2x1xf32>
    %38 = vector.broadcast %37 : vector<2x1xf32> to vector<2x64xf32>
    %39 = arith.mulf %27, %38 : vector<2x64xf32>
    %cst_30 = arith.constant dense<0.000000e+00> : vector<2x2xf32>
    %40 = tpu.matmul %33, %39, %cst_30 {dimension_numbers = #tpu.dot_dimension_numbers<[1], [1], [0], [0], [0, 0, 1, 0], [], []>} : vector<2x64xf32>, vector<2x64xf32>, vector<2x2xf32> -> vector<2x2xf32>
    %41 = vector.broadcast %12 : f32 to vector<2x2xf32>
    %42 = arith.mulf %40, %41 : vector<2x2xf32>
    %c0_31 = arith.constant 0 : index
    %c0_32 = arith.constant 0 : index
    %43 = vector.load %arg7[%c0_31, %c0_32] : memref<2x2xf32, #tpu.memory_space<vmem>>, vector<2x2xf32>
    tpu.vector_store %arg7[%c0_31, %c0_32], %42 {strides = array<i32>} : memref<2x2xf32, #tpu.memory_space<vmem>>, vector<2x2xf32>,
    %cst_33 = arith.constant dense<0.000000e+00> : vector<2x2xf32>
    %44 = tpu.matmul %39, %33, %cst_33 {dimension_numbers = #tpu.dot_dimension_numbers<[1], [1], [0], [0], [0, 0, 1, 0], [], []>} : vector<2x64xf32>, vector<2x64xf32>, vector<2x2xf32> -> vector<2x2xf32>
    %45 = vector.broadcast %12 : f32 to vector<2x2xf32>
    %46 = arith.mulf %44, %45 : vector<2x2xf32>
    %c0_34 = arith.constant 0 : index
    %c0_35 = arith.constant 0 : index
    %47 = vector.load %arg8[%c0_34, %c0_35] : memref<2x2xf32, #tpu.memory_space<vmem>>, vector<2x2xf32>
    tpu.vector_store %arg8[%c0_34, %c0_35], %46 {strides = array<i32>} : memref<2x2xf32, #tpu.memory_space<vmem>>, vector<2x2xf32>,
    %c0_36 = arith.constant 0 : index
    %c0_37 = arith.constant 0 : index
    %48 = vector.load %arg9[%c0_36, %c0_37] : memref<2x64xf32, #tpu.memory_space<vmem>>, vector<2x64xf32>
    tpu.vector_store %arg9[%c0_36, %c0_37], %33 {strides = array<i32>} : memref<2x64xf32, #tpu.memory_space<vmem>>, vector<2x64xf32>,
    %c0_38 = arith.constant 0 : index
    %c0_39 = arith.constant 0 : index
    %49 = vector.load %arg10[%c0_38, %c0_39] : memref<2x64xf32, #tpu.memory_space<vmem>>, vector<2x64xf32>
    tpu.vector_store %arg10[%c0_38, %c0_39], %39 {strides = array<i32>} : memref<2x64xf32, #tpu.memory_space<vmem>>, vector<2x64xf32>,
    return
  }
  func.func @transform_1(%arg0: i32, %arg1: memref<2xi32, #tpu.memory_space<smem>>) -> (i32, i32) {
    %c0_i32 = arith.constant 0 : i32
    %c0_i32_0 = arith.constant 0 : i32
    %c0_i32_1 = arith.constant 0 : i32
    return %c0_i32, %c0_i32_0 : i32, i32
  }
  func.func @transform_2(%arg0: i32, %arg1: memref<2xi32, #tpu.memory_space<smem>>) -> (i32, i32) {
    %c0_i32 = arith.constant 0 : i32
    %c0_i32_0 = arith.constant 0 : i32
    %c0_i32_1 = arith.constant 0 : i32
    return %c0_i32, %c0_i32_0 : i32, i32
  }
  func.func @transform_3(%arg0: i32, %arg1: memref<2xi32, #tpu.memory_space<smem>>) -> (i32, i32) {
    %c0_i32 = arith.constant 0 : i32
    %c0_i32_0 = arith.constant 0 : i32
    %c0_i32_1 = arith.constant 0 : i32
    return %c0_i32, %c0_i32_0 : i32, i32
  }
  func.func @transform_4(%arg0: i32, %arg1: memref<2xi32, #tpu.memory_space<smem>>) -> (i32, i32) {
    %c0_i32 = arith.constant 0 : i32
    %c0_i32_0 = arith.constant 0 : i32
    %c0_i32_1 = arith.constant 0 : i32
    return %c0_i32, %c0_i32_0 : i32, i32
  }
  func.func @transform_5(%arg0: i32, %arg1: memref<2xi32, #tpu.memory_space<smem>>) -> (i32, i32) {
    %c0_i32 = arith.constant 0 : i32
    %c0_i32_0 = arith.constant 0 : i32
    %c0_i32_1 = arith.constant 0 : i32
    return %c0_i32, %c0_i32_0 : i32, i32
  }
  func.func @transform_6(%arg0: i32, %arg1: memref<2xi32, #tpu.memory_space<smem>>) -> (i32, i32) {
    %c0_i32 = arith.constant 0 : i32
    %c0_i32_0 = arith.constant 0 : i32
    %c0_i32_1 = arith.constant 0 : i32
    return %c0_i32, %c0_i32_0 : i32, i32
  }
  func.func @transform_7(%arg0: i32, %arg1: memref<2xi32, #tpu.memory_space<smem>>) -> (i32, i32) {
    %c0_i32 = arith.constant 0 : i32
    %c0_i32_0 = arith.constant 0 : i32
    %c0_i32_1 = arith.constant 0 : i32
    return %c0_i32, %c0_i32_0 : i32, i32
  }
  func.func @transform_8(%arg0: i32, %arg1: memref<2xi32, #tpu.memory_space<smem>>) -> (i32, i32) {
    %c0_i32 = arith.constant 0 : i32
    %c0_i32_0 = arith.constant 0 : i32
    %c0_i32_1 = arith.constant 0 : i32
    return %c0_i32, %c0_i32_0 : i32, i32
  }
  func.func @transform_9(%arg0: i32, %arg1: memref<2xi32, #tpu.memory_space<smem>>) -> (i32, i32) {
    %c0_i32 = arith.constant 0 : i32
    %c0_i32_0 = arith.constant 0 : i32
    %c0_i32_1 = arith.constant 0 : i32
    return %c0_i32, %c0_i32_0 : i32, i32
  }
}

</mosaic_0001>

<llo_original>
// kernel: tpu_custom_call.1
$region0: #{tpu_custom_call.1}
  #allocation0 [shape = 'u32[]', space=smem, size = 0x4, offset = 0x4, fixed_abs, tag = 'smem constant byte address 0x4 - core index']
  #allocation1 [shape = 'u32[144,128]{1,0:T(1,128)}', space=vmem, size = 0x12000, scoped, tag = 'internal scratch']
  #allocation2 [shape = 'f32[2,32]{1,0:T(2,128)}', space=vmem, size = 0x400, scoped, tag = 'scratch operand']
  #allocation3 [shape = 's32[2]{0}', space=sflag, size = 0x8, scoped, tag = 'scratch operand']
  #allocation4 [shape = 's32[1]{0}', space=sflag, size = 0x4, scoped, tag = 'scoped memory for tpu_custom_call.1']
  #allocation5 [shape = 'u8[512]{0}', space=smem, size = 0x200, scoped, tag = 'prefetched SMEM operand 0']
  #allocation6 [shape = 'f32[1,1]{1,0:T(1,128)S(6)}', space=smem, size = 0x200, scoped, tag = 'scoped memory for tpu_custom_call.1']
  #allocation19 [shape = 's32[]', space=sflag, size = 0x4, offset = 0, fixed_abs, tag = 'sflag constant byte address 0x0 - dummy sync flag']
  #allocation20 [shape = 's32[]', space=sflag, size = 0x4, offset = 0, fixed_abs, tag = 'sflag constant byte address 0x0 - dummy sync flag']
  #allocation21 [shape = 'u32[]', space=smem, size = 0x4, offset = 0x44, fixed_abs, tag = 'smem constant byte address 0x44 - assertion arg 0']
  #allocation22 [shape = 'u32[]', space=smem, size = 0x4, offset = 0x48, fixed_abs, tag = 'smem constant byte address 0x48 - assertion arg 1']
  #allocation23 [shape = 's32[]', space=sflag, size = 0x4, offset = 0, fixed_abs, tag = 'sflag constant byte address 0x0 - dummy sync flag']
  #allocation24 [shape = 's32[]', space=sflag, size = 0x4, offset = 0, fixed_abs, tag = 'sflag constant byte address 0x0 - dummy sync flag']
  %s0 = inlined_call_operand.vmem [shape: s32[2], index: 0, kind: input, shape index: {}]
  %s1 = inlined_call_operand.hbm [shape: f32[16,32], index: 1, kind: input, shape index: {}]
  %s2 = inlined_call_operand.vmem [shape: f32[2,32], index: 2, kind: input, shape index: {}]
  %s3 = inlined_call_operand.hbm [shape: f32[32,64], index: 3, kind: input, shape index: {}]
  %s4 = inlined_call_operand.hbm [shape: f32[32,64], index: 4, kind: input, shape index: {}]
  %s5 = inlined_call_operand.<no memory space> [shape: f32[1,1], index: 5, kind: input, shape index: {}]
  %s6 = inlined_call_operand.hbm [shape: f32[2,2], index: 6, kind: output, shape index: {0}]
  %s7 = inlined_call_operand.hbm [shape: f32[2,2], index: 7, kind: output, shape index: {1}]
  %s8 = inlined_call_operand.hbm [shape: f32[2,64], index: 8, kind: output, shape index: {2}]
  %s9 = inlined_call_operand.hbm [shape: f32[2,64], index: 9, kind: output, shape index: {3}]
  %s10 = inlined_call_operand.hbm [shape: f32[2,32], index: 10, kind: output, shape index: {4}]
  %11 = xla_tuple %s6, %s7, %s8, %s9, %s10
  %s12 = sld [smem:[#allocation0]]
  $region74: #{tpu_custom_call.1} parent=0
    _
  %s14 = ssub.s32 1, %s12
  %s15 = scalar_select 0, %s14, %s12
  %s16 = sshll.u32 %s0, 4
  %s17 = int_to_ptr.vmem [resolvable:$true] %s16
  %19 = dma.vmem_to_smem %s17, 16, [#allocation5], [#allocation4]
  %20 = sst [smem:[#allocation6]] %s5
  %21 = dma.done [#allocation4], 16
  %22 = sfence
  $region1: #{tpu_custom_call.1} parent=0
    #allocation7 [shape = 'u8[16384]{0}', space=vmem, size = 0x4000, scoped, tag = 'input window, operand 3, single buffered']
    #allocation8 [shape = 's32[1]{0}', space=sflag, size = 0x4, scoped, tag = 'scoped memory for tpu_custom_call.1']
    #allocation9 [shape = 's32[1]{0}', space=sflag, size = 0x4, scoped, tag = 'scoped memory for tpu_custom_call.1']
    #allocation10 [shape = 'u8[16384]{0}', space=vmem, size = 0x4000, scoped, tag = 'input window, operand 4, single buffered']
    #allocation11 [shape = 's32[1]{0}', space=sflag, size = 0x4, scoped, tag = 'scoped memory for tpu_custom_call.1']
    #allocation12 [shape = 'u8[1024]{0}', space=vmem, size = 0x400, scoped, tag = 'output window, operand 0, single buffered']
    #allocation13 [shape = 'u8[1024]{0}', space=vmem, size = 0x400, scoped, tag = 'output window, operand 1, single buffered']
    #allocation14 [shape = 's32[1]{0}', space=sflag, size = 0x4, scoped, tag = 'scoped memory for tpu_custom_call.1']
    #allocation15 [shape = 'u8[1024]{0}', space=vmem, size = 0x400, scoped, tag = 'output window, operand 2, single buffered']
    #allocation16 [shape = 'u8[1024]{0}', space=vmem, size = 0x400, scoped, tag = 'output window, operand 3, single buffered']
    #allocation17 [shape = 's32[1]{0}', space=sflag, size = 0x4, scoped, tag = 'scoped memory for tpu_custom_call.1']
    #allocation18 [shape = 'u8[1024]{0}', space=vmem, size = 0x400, scoped, tag = 'output window, operand 4, single buffered']
    %23 = vsyncpa [#allocation8], 0
    %24 = vsyncpa [#allocation11], 0
    %25 = vsyncpa [#allocation9], 0
    %26 = vsyncpa [#allocation14], 0
    %27 = vsyncpa [#allocation17], 0
    // Predicated region
    $region2: #{tpu_custom_call.1} parent=1 // pred_check
      _
    $region3: #{tpu_custom_call.1} parent=1 // pred_check_branch
      %29 = sbr.rel (0) target = $region5
    $region4: #{tpu_custom_call.1} parent=1 // pred_region
      _
    $region5: #{tpu_custom_call.1} parent=1 // pred_fallthru
      _
    // Predicated region
    $region6: #{tpu_custom_call.1} parent=1 // pred_check
      _
    $region7: #{tpu_custom_call.1} parent=1 // pred_check_branch
      %31 = sbr.rel (0) target = $region9
    $region8: #{tpu_custom_call.1} parent=1 // pred_region
      %s33 = ssub.s32 512, 512
      %34 = vsyncadd [#allocation8], %s33
      %s35 = sshll.u32 [#allocation7], 4
      %s36 = int_to_ptr.vmem [resolvable:$true] %s35
      %41 = dma.hbm_to_vmem [thread:$0]  %s3, 512, %s36, [#allocation8], 128, 128, 8
    $region9: #{tpu_custom_call.1} parent=1 // pred_fallthru
      _
    // Predicated region
    $region10: #{tpu_custom_call.1} parent=1 // pred_check
      _
    $region11: #{tpu_custom_call.1} parent=1 // pred_check_branch
      %43 = sbr.rel (0) target = $region13
    $region12: #{tpu_custom_call.1} parent=1 // pred_region
      %s45 = ssub.s32 512, 512
      %46 = vsyncadd [#allocation11], %s45
      %s47 = sshll.u32 [#allocation10], 4
      %s48 = int_to_ptr.vmem [resolvable:$true] %s47
      %53 = dma.hbm_to_vmem [thread:$0]  %s4, 512, %s48, [#allocation11], 128, 128, 8
    $region13: #{tpu_custom_call.1} parent=1 // pred_fallthru
      _
    // Predicated region
    $region14: #{tpu_custom_call.1} parent=1 // pred_check
      _
    $region15: #{tpu_custom_call.1} parent=1 // pred_check_branch
      %55 = sbr.rel (0) target = $region17
    $region16: #{tpu_custom_call.1} parent=1 // pred_region
      _
    $region17: #{tpu_custom_call.1} parent=1 // pred_fallthru
      _
    // Predicated region
    $region18: #{tpu_custom_call.1} parent=1 // pred_check
      _
    $region19: #{tpu_custom_call.1} parent=1 // pred_check_branch
      %57 = sbr.rel (0) target = $region21
    $region20: #{tpu_custom_call.1} parent=1 // pred_region
      %58 = dma.done [#allocation8], 512
    $region21: #{tpu_custom_call.1} parent=1 // pred_fallthru
      _
    // Predicated region
    $region22: #{tpu_custom_call.1} parent=1 // pred_check
      _
    $region23: #{tpu_custom_call.1} parent=1 // pred_check_branch
      %60 = sbr.rel (0) target = $region25
    $region24: #{tpu_custom_call.1} parent=1 // pred_region
      %61 = dma.done [#allocation11], 512
    $region25: #{tpu_custom_call.1} parent=1 // pred_fallthru
      _
    %s62 = sld [smem:[#allocation5]]
    %s63 = smul.addr %s62, 16
    %s64 = scalar_lea.hbm %s1, %s63
    // Predicated region
    $region26: #{tpu_custom_call.1} parent=1 // pred_check
      _
    $region27: #{tpu_custom_call.1} parent=1 // pred_check_branch
      %66 = sbr.rel target = $region29
    $region28: #{tpu_custom_call.1} parent=1 // pred_region
      %67 = sst [smem:[#allocation21]] [#allocation20]
      %68 = sst [smem:[#allocation22]] [#allocation19]
    $region29: #{tpu_custom_call.1} parent=1 // pred_fallthru
      _
    %70 = shalt.err (0)
    %s72 = sshll.u32 [#allocation2], 4
    %s73 = int_to_ptr.vmem [resolvable:$true] %s72
    %75 = dma.hbm_to_vmem [thread:$0]  %s64, 16, %s73, [#allocation3]
    %s76 = sld [smem:[#allocation5 + $0x1]]
    %s77 = sadd.s32 %s76, 8
    %s78 = smul.addr %s77, 16
    %s79 = scalar_lea.hbm %s1, %s78
    %s80 = scalar_lea.vmem [#allocation2], 1
    %s81 = scalar_lea.sflag [#allocation3], 1
    // Predicated region
    $region30: #{tpu_custom_call.1} parent=1 // pred_check
      _
    $region31: #{tpu_custom_call.1} parent=1 // pred_check_branch
      %83 = sbr.rel target = $region33
    $region32: #{tpu_custom_call.1} parent=1 // pred_region
      %84 = sst [smem:[#allocation21]] [#allocation24]
      %85 = sst [smem:[#allocation22]] [#allocation23]
    $region33: #{tpu_custom_call.1} parent=1 // pred_fallthru
      _
    %87 = shalt.err (0)
    %s89 = sshll.u32 %s80, 4
    %s90 = int_to_ptr.vmem [resolvable:$true] %s89
    %92 = dma.hbm_to_vmem [thread:$0]  %s79, 16, %s90, %s81
    %s93 = sld [smem:[#allocation6]]
    %s94 = smul.u32 1, 1
    %s95 = sshll.u32 %s94, 4
    %96 = dma.done [#allocation3], %s95
    %s97 = sshll.u32 %s94, 4
    %98 = dma.done %s81, %s97
    %v99 = vld [vmem:[#allocation2] sm:$0x3]
    %vm100 = vcmask 254976
    %101 = vst.msk [vmem:[#allocation18] sm:$0x3] %vm100, %v99
    %v102 = vld [vmem:[#allocation7] sm:$0xff]
    %v103 = vld [vmem:[#allocation7 + $0x8] sm:$0xff]
    %v104 = vld [vmem:[#allocation7 + $0x10] sm:$0xff]
    %v105 = vld [vmem:[#allocation7 + $0x18] sm:$0xff]
    %vm106 = vcmask 261120
    %v108 = vsel %vm106, %v99, 0
    %110 = vmatprep.subr.mxu0 0.0
    %111 = vmatpush1.msra.mxu0 %v102
    %112 = vmatprep.subr.mxu0 0.0
    %113 = vmatpush1.msra.mxu0 %v103
    %114 = vmatprep.subr.mxu0 0.0
    %115 = vmatpush1.msra.mxu0 %v104
    %116 = vmatprep.subr.mxu0 0.0
    %117 = vmatpush1.msra.mxu0 %v105
    %118 = vmatprep.subr.mxu0 0.0
    %119 = vmatpush1.msra.mxu0 0.0
    %120 = vmatprep.subr.mxu0 0.0
    %121 = vmatpush1.msra.mxu0 0.0
    %122 = vmatprep.subr.mxu0 0.0
    %123 = vmatpush1.msra.mxu0 0.0
    %124 = vmatprep.subr.mxu0 0.0
    %125 = vmatpush1.msra.mxu0 0.0
    %126 = vmatprep.subr.mxu0 0.0
    %127 = vmatpush1.msra.mxu0 0.0
    %128 = vmatprep.subr.mxu0 0.0
    %129 = vmatpush1.msra.mxu0 0.0
    %130 = vmatprep.subr.mxu0 0.0
    %131 = vmatpush1.msra.mxu0 0.0
    %132 = vmatprep.subr.mxu0 0.0
    %133 = vmatpush1.msra.mxu0 0.0
    %134 = vmatprep.subr.mxu0 0.0
    %135 = vmatpush1.msra.mxu0 0.0
    %136 = vmatprep.subr.mxu0 0.0
    %137 = vmatpush1.msra.mxu0 0.0
    %138 = vmatprep.subr.mxu0 0.0
    %139 = vmatpush1.msra.mxu0 0.0
    %140 = vmatprep.subr.mxu0 0.0
    %141 = vmatpush1.msra.mxu0 0.0
    %142 = vmatprep.subr.mxu0 0.0
    %143 = vmatpush1.msra.mxu0 0.0
    %144 = vmatprep.subr.mxu0 0.0
    %145 = vmatpush1.msra.mxu0 0.0
    %146 = vmatprep.subr.mxu0 0.0
    %147 = vmatpush1.msra.mxu0 0.0
    %148 = vmatprep.subr.mxu0 0.0
    %149 = vmatpush1.msra.mxu0 0.0
    %150 = vmatprep.subr.mxu0 0.0
    %151 = vmatpush1.msra.mxu0 0.0
    %152 = vmatprep.subr.mxu0 0.0
    %153 = vmatpush1.msra.mxu0 0.0
    %154 = vmatprep.subr.mxu0 0.0
    %155 = vmatpush1.msra.mxu0 0.0
    %156 = vmatprep.subr.mxu0 0.0
    %157 = vmatpush1.msra.mxu0 0.0
    %158 = vmatprep.subr.mxu0 0.0
    %159 = vmatpush1.msra.mxu0 0.0
    %160 = vmatprep.subr.mxu0 0.0
    %161 = vmatpush1.msra.mxu0 0.0
    %162 = vmatprep.subr.mxu0 0.0
    %163 = vmatpush1.msra.mxu0 0.0
    %164 = vmatprep.subr.mxu0 0.0
    %165 = vmatpush1.msra.mxu0 0.0
    %166 = vmatprep.subr.mxu0 0.0
    %167 = vmatpush1.msra.mxu0 0.0
    %168 = vmatprep.subr.mxu0 0.0
    %169 = vmatpush1.msra.mxu0 0.0
    %170 = vmatprep.subr.mxu0 0.0
    %171 = vmatpush1.msra.mxu0 0.0
    %172 = vmatprep.subr.mxu0 0.0
    %173 = vmatpush1.msra.mxu0 0.0
    %174 = vmatprep.mubr.f32.mxu0 0.0
    %175 = vmatmul.mubr.f32.gmra.mrb[0].mxu0 %v108
    %v176 = vpop.f32.mrb[0].mxu0
    %v177 = vadd.f32 0.0, %v176
    %v178 = vpop.f32.mrb[0].mxu0
    %179 = vdwg.mxu0
    %v180 = vld [vmem:[%s2] sm:$0x3]
    %v181 = vld [vmem:[#allocation10] sm:$0xff]
    %v182 = vld [vmem:[#allocation10 + $0x8] sm:$0xff]
    %v183 = vld [vmem:[#allocation10 + $0x10] sm:$0xff]
    %v184 = vld [vmem:[#allocation10 + $0x18] sm:$0xff]
    %v186 = vsel %vm106, %v180, 0
    %188 = vmatprep.subr.mxu0 0.0
    %189 = vmatpush1.msra.mxu0 %v181
    %190 = vmatprep.subr.mxu0 0.0
    %191 = vmatpush1.msra.mxu0 %v182
    %192 = vmatprep.subr.mxu0 0.0
    %193 = vmatpush1.msra.mxu0 %v183
    %194 = vmatprep.subr.mxu0 0.0
    %195 = vmatpush1.msra.mxu0 %v184
    %196 = vmatprep.subr.mxu0 0.0
    %197 = vmatpush1.msra.mxu0 0.0
    %198 = vmatprep.subr.mxu0 0.0
    %199 = vmatpush1.msra.mxu0 0.0
    %200 = vmatprep.subr.mxu0 0.0
    %201 = vmatpush1.msra.mxu0 0.0
    %202 = vmatprep.subr.mxu0 0.0
    %203 = vmatpush1.msra.mxu0 0.0
    %204 = vmatprep.subr.mxu0 0.0
    %205 = vmatpush1.msra.mxu0 0.0
    %206 = vmatprep.subr.mxu0 0.0
    %207 = vmatpush1.msra.mxu0 0.0
    %208 = vmatprep.subr.mxu0 0.0
    %209 = vmatpush1.msra.mxu0 0.0
    %210 = vmatprep.subr.mxu0 0.0
    %211 = vmatpush1.msra.mxu0 0.0
    %212 = vmatprep.subr.mxu0 0.0
    %213 = vmatpush1.msra.mxu0 0.0
    %214 = vmatprep.subr.mxu0 0.0
    %215 = vmatpush1.msra.mxu0 0.0
    %216 = vmatprep.subr.mxu0 0.0
    %217 = vmatpush1.msra.mxu0 0.0
    %218 = vmatprep.subr.mxu0 0.0
    %219 = vmatpush1.msra.mxu0 0.0
    %220 = vmatprep.subr.mxu0 0.0
    %221 = vmatpush1.msra.mxu0 0.0
    %222 = vmatprep.subr.mxu0 0.0
    %223 = vmatpush1.msra.mxu0 0.0
    %224 = vmatprep.subr.mxu0 0.0
    %225 = vmatpush1.msra.mxu0 0.0
    %226 = vmatprep.subr.mxu0 0.0
    %227 = vmatpush1.msra.mxu0 0.0
    %228 = vmatprep.subr.mxu0 0.0
    %229 = vmatpush1.msra.mxu0 0.0
    %230 = vmatprep.subr.mxu0 0.0
    %231 = vmatpush1.msra.mxu0 0.0
    %232 = vmatprep.subr.mxu0 0.0
    %233 = vmatpush1.msra.mxu0 0.0
    %234 = vmatprep.subr.mxu0 0.0
    %235 = vmatpush1.msra.mxu0 0.0
    %236 = vmatprep.subr.mxu0 0.0
    %237 = vmatpush1.msra.mxu0 0.0
    %238 = vmatprep.subr.mxu0 0.0
    %239 = vmatpush1.msra.mxu0 0.0
    %240 = vmatprep.subr.mxu0 0.0
    %241 = vmatpush1.msra.mxu0 0.0
    %242 = vmatprep.subr.mxu0 0.0
    %243 = vmatpush1.msra.mxu0 0.0
    %244 = vmatprep.subr.mxu0 0.0
    %245 = vmatpush1.msra.mxu0 0.0
    %246 = vmatprep.subr.mxu0 0.0
    %247 = vmatpush1.msra.mxu0 0.0
    %248 = vmatprep.subr.mxu0 0.0
    %249 = vmatpush1.msra.mxu0 0.0
    %250 = vmatprep.subr.mxu0 0.0
    %251 = vmatpush1.msra.mxu0 0.0
    %252 = vmatprep.mubr.f32.mxu0 0.0
    %253 = vmatmul.mubr.f32.gmra.mrb[0].mxu0 %v186
    %v254 = vpop.f32.mrb[0].mxu0
    %v255 = vadd.f32 0.0, %v254
    %v256 = vpop.f32.mrb[0].mxu0
    %257 = vdwg.mxu0
    %v258 = vmul.f32 %v177, %v177
    %vm259 = vcmask 517120
    %v260 = vsel %vm259, %v258, 0.0
    %261 = vadd.xlane.f32.xlu0 %v260
    %v262 = vpop.xlane.xlu0 %261
    %v263 = vrsqrt.pop %v262
    %v264 = vmul.f32 %v177, %v263
    %v265 = vmul.f32 %v255, %v255
    %v266 = vsel %vm259, %v265, 0.0
    %267 = vadd.xlane.f32.xlu0 %v266
    %v268 = vpop.xlane.xlu0 %267
    %v269 = vrsqrt.pop %v268
    %v270 = vmul.f32 %v255, %v269
    %vm271 = vcmask 523264
    %v273 = vsel %vm271, %v264, 0
    %v276 = vsel %vm271, %v270, 0
    %278 = vmatprep.subr.mxu0 0.0
    %279 = vmatpush1.xpose.msra.mxu0 %v276
    %280 = vmatprep.subr.mxu0 0.0
    %281 = vmatpush1.xpose.msra.mxu0 0.0
    %282 = vmatprep.subr.mxu0 0.0
    %283 = vmatpush1.xpose.msra.mxu0 0.0
    %284 = vmatprep.subr.mxu0 0.0
    %285 = vmatpush1.xpose.msra.mxu0 0.0
    %286 = vmatprep.subr.mxu0 0.0
    %287 = vmatpush1.xpose.msra.mxu0 0.0
    %288 = vmatprep.subr.mxu0 0.0
    %289 = vmatpush1.xpose.msra.mxu0 0.0
    %290 = vmatprep.subr.mxu0 0.0
    %291 = vmatpush1.xpose.msra.mxu0 0.0
    %292 = vmatprep.subr.mxu0 0.0
    %293 = vmatpush1.xpose.msra.mxu0 0.0
    %294 = vmatprep.subr.mxu0 0.0
    %295 = vmatpush1.xpose.msra.mxu0 0.0
    %296 = vmatprep.subr.mxu0 0.0
    %297 = vmatpush1.xpose.msra.mxu0 0.0
    %298 = vmatprep.subr.mxu0 0.0
    %299 = vmatpush1.xpose.msra.mxu0 0.0
    %300 = vmatprep.subr.mxu0 0.0
    %301 = vmatpush1.xpose.msra.mxu0 0.0
    %302 = vmatprep.subr.mxu0 0.0
    %303 = vmatpush1.xpose.msra.mxu0 0.0
    %304 = vmatprep.subr.mxu0 0.0
    %305 = vmatpush1.xpose.msra.mxu0 0.0
    %306 = vmatprep.subr.mxu0 0.0
    %307 = vmatpush1.xpose.msra.mxu0 0.0
    %308 = vmatprep.subr.mxu0 0.0
    %309 = vmatpush1.xpose.msra.mxu0 0.0
    %310 = vmatprep.subr.mxu0 0.0
    %311 = vmatpush1.xpose.msra.mxu0 0.0
    %312 = vmatprep.subr.mxu0 0.0
    %313 = vmatpush1.xpose.msra.mxu0 0.0
    %314 = vmatprep.subr.mxu0 0.0
    %315 = vmatpush1.xpose.msra.mxu0 0.0
    %316 = vmatprep.subr.mxu0 0.0
    %317 = vmatpush1.xpose.msra.mxu0 0.0
    %318 = vmatprep.subr.mxu0 0.0
    %319 = vmatpush1.xpose.msra.mxu0 0.0
    %320 = vmatprep.subr.mxu0 0.0
    %321 = vmatpush1.xpose.msra.mxu0 0.0
    %322 = vmatprep.subr.mxu0 0.0
    %323 = vmatpush1.xpose.msra.mxu0 0.0
    %324 = vmatprep.subr.mxu0 0.0
    %325 = vmatpush1.xpose.msra.mxu0 0.0
    %326 = vmatprep.subr.mxu0 0.0
    %327 = vmatpush1.xpose.msra.mxu0 0.0
    %328 = vmatprep.subr.mxu0 0.0
    %329 = vmatpush1.xpose.msra.mxu0 0.0
    %330 = vmatprep.subr.mxu0 0.0
    %331 = vmatpush1.xpose.msra.mxu0 0.0
    %332 = vmatprep.subr.mxu0 0.0
    %333 = vmatpush1.xpose.msra.mxu0 0.0
    %334 = vmatprep.subr.mxu0 0.0
    %335 = vmatpush1.xpose.msra.mxu0 0.0
    %336 = vmatprep.subr.mxu0 0.0
    %337 = vmatpush1.xpose.msra.mxu0 0.0
    %338 = vmatprep.subr.mxu0 0.0
    %339 = vmatpush1.xpose.msra.mxu0 0.0
    %340 = vmatprep.subr.mxu0 0.0
    %341 = vmatpush1.xpose.msra.mxu0 0.0
    %342 = vmatprep.mubr.f32.mxu0 0.0
    %343 = vmatmul.mubr.f32.gmra.mrb[0].mxu0 %v273
    %v344 = vpop.f32.mrb[0].mxu0
    %v345 = vadd.f32 0.0, %v344
    %v346 = vpop.f32.mrb[0].mxu0
    %347 = vdwg.mxu0
    %v348 = vstv %s93
    %v349 = vmul.f32 %v345, %v348
    %vm350 = vcmask 9216
    %351 = vst.msk [vmem:[#allocation12] sm:$0x3] %vm350, %v349
    %352 = vmatprep.subr.mxu0 0.0
    %353 = vmatpush1.xpose.msra.mxu0 %v273
    %354 = vmatprep.subr.mxu0 0.0
    %355 = vmatpush1.xpose.msra.mxu0 0.0
    %356 = vmatprep.subr.mxu0 0.0
    %357 = vmatpush1.xpose.msra.mxu0 0.0
    %358 = vmatprep.subr.mxu0 0.0
    %359 = vmatpush1.xpose.msra.mxu0 0.0
    %360 = vmatprep.subr.mxu0 0.0
    %361 = vmatpush1.xpose.msra.mxu0 0.0
    %362 = vmatprep.subr.mxu0 0.0
    %363 = vmatpush1.xpose.msra.mxu0 0.0
    %364 = vmatprep.subr.mxu0 0.0
    %365 = vmatpush1.xpose.msra.mxu0 0.0
    %366 = vmatprep.subr.mxu0 0.0
    %367 = vmatpush1.xpose.msra.mxu0 0.0
    %368 = vmatprep.subr.mxu0 0.0
    %369 = vmatpush1.xpose.msra.mxu0 0.0
    %370 = vmatprep.subr.mxu0 0.0
    %371 = vmatpush1.xpose.msra.mxu0 0.0
    %372 = vmatprep.subr.mxu0 0.0
    %373 = vmatpush1.xpose.msra.mxu0 0.0
    %374 = vmatprep.subr.mxu0 0.0
    %375 = vmatpush1.xpose.msra.mxu0 0.0
    %376 = vmatprep.subr.mxu0 0.0
    %377 = vmatpush1.xpose.msra.mxu0 0.0
    %378 = vmatprep.subr.mxu0 0.0
    %379 = vmatpush1.xpose.msra.mxu0 0.0
    %380 = vmatprep.subr.mxu0 0.0
    %381 = vmatpush1.xpose.msra.mxu0 0.0
    %382 = vmatprep.subr.mxu0 0.0
    %383 = vmatpush1.xpose.msra.mxu0 0.0
    %384 = vmatprep.subr.mxu0 0.0
    %385 = vmatpush1.xpose.msra.mxu0 0.0
    %386 = vmatprep.subr.mxu0 0.0
    %387 = vmatpush1.xpose.msra.mxu0 0.0
    %388 = vmatprep.subr.mxu0 0.0
    %389 = vmatpush1.xpose.msra.mxu0 0.0
    %390 = vmatprep.subr.mxu0 0.0
    %391 = vmatpush1.xpose.msra.mxu0 0.0
    %392 = vmatprep.subr.mxu0 0.0
    %393 = vmatpush1.xpose.msra.mxu0 0.0
    %394 = vmatprep.subr.mxu0 0.0
    %395 = vmatpush1.xpose.msra.mxu0 0.0
    %396 = vmatprep.subr.mxu0 0.0
    %397 = vmatpush1.xpose.msra.mxu0 0.0
    %398 = vmatprep.subr.mxu0 0.0
    %399 = vmatpush1.xpose.msra.mxu0 0.0
    %400 = vmatprep.subr.mxu0 0.0
    %401 = vmatpush1.xpose.msra.mxu0 0.0
    %402 = vmatprep.subr.mxu0 0.0
    %403 = vmatpush1.xpose.msra.mxu0 0.0
    %404 = vmatprep.subr.mxu0 0.0
    %405 = vmatpush1.xpose.msra.mxu0 0.0
    %406 = vmatprep.subr.mxu0 0.0
    %407 = vmatpush1.xpose.msra.mxu0 0.0
    %408 = vmatprep.subr.mxu0 0.0
    %409 = vmatpush1.xpose.msra.mxu0 0.0
    %410 = vmatprep.subr.mxu0 0.0
    %411 = vmatpush1.xpose.msra.mxu0 0.0
    %412 = vmatprep.subr.mxu0 0.0
    %413 = vmatpush1.xpose.msra.mxu0 0.0
    %414 = vmatprep.subr.mxu0 0.0
    %415 = vmatpush1.xpose.msra.mxu0 0.0
    %416 = vmatprep.mubr.f32.mxu0 0.0
    %417 = vmatmul.mubr.f32.gmra.mrb[0].mxu0 %v276
    %v418 = vpop.f32.mrb[0].mxu0
    %v419 = vadd.f32 0.0, %v418
    %v420 = vpop.f32.mrb[0].mxu0
    %421 = vdwg.mxu0
    %v422 = vmul.f32 %v419, %v348
    %423 = vst.msk [vmem:[#allocation13] sm:$0x3] %vm350, %v422
    %424 = vst.msk [vmem:[#allocation15] sm:$0x3] %vm259, %v264
    %425 = vst.msk [vmem:[#allocation16] sm:$0x3] %vm259, %v270
    // Predicated region
    $region34: #{tpu_custom_call.1} parent=1 // pred_check
      _
    $region35: #{tpu_custom_call.1} parent=1 // pred_check_branch
      %427 = sbr.rel (0) target = $region37
    $region36: #{tpu_custom_call.1} parent=1 // pred_region
      %s429 = ssub.s32 32, 32
      %430 = vsyncadd [#allocation9], %s429
      %s432 = sshll.u32 [#allocation12], 4
      %s433 = int_to_ptr.vmem [resolvable:$true] %s432
      %435 = dma.vmem_to_hbm [thread:$0]  %s433, 32, %s6, [#allocation9]
    $region37: #{tpu_custom_call.1} parent=1 // pred_fallthru
      _
    // Predicated region
    $region38: #{tpu_custom_call.1} parent=1 // pred_check
      _
    $region39: #{tpu_custom_call.1} parent=1 // pred_check_branch
      %437 = sbr.rel (0) target = $region41
    $region40: #{tpu_custom_call.1} parent=1 // pred_region
      %s439 = ssub.s32 32, 32
      %440 = vsyncadd [#allocation14], %s439
      %s442 = sshll.u32 [#allocation13], 4
      %s443 = int_to_ptr.vmem [resolvable:$true] %s442
      %445 = dma.vmem_to_hbm [thread:$0]  %s443, 32, %s7, [#allocation14]
    $region41: #{tpu_custom_call.1} parent=1 // pred_fallthru
      _
    // Predicated region
    $region42: #{tpu_custom_call.1} parent=1 // pred_check
      _
    $region43: #{tpu_custom_call.1} parent=1 // pred_check_branch
      %447 = sbr.rel (0) target = $region45
    $region44: #{tpu_custom_call.1} parent=1 // pred_region
      %s449 = ssub.s32 32, 32
      %450 = vsyncadd [#allocation14], %s449
      %s452 = sshll.u32 [#allocation15], 4
      %s453 = int_to_ptr.vmem [resolvable:$true] %s452
      %455 = dma.vmem_to_hbm [thread:$0]  %s453, 32, %s8, [#allocation14]
    $region45: #{tpu_custom_call.1} parent=1 // pred_fallthru
      _
    // Predicated region
    $region46: #{tpu_custom_call.1} parent=1 // pred_check
      _
    $region47: #{tpu_custom_call.1} parent=1 // pred_check_branch
      %457 = sbr.rel (0) target = $region49
    $region48: #{tpu_custom_call.1} parent=1 // pred_region
      %s459 = ssub.s32 32, 32
      %460 = vsyncadd [#allocation17], %s459
      %s462 = sshll.u32 [#allocation16], 4
      %s463 = int_to_ptr.vmem [resolvable:$true] %s462
      %465 = dma.vmem_to_hbm [thread:$0]  %s463, 32, %s9, [#allocation17]
    $region49: #{tpu_custom_call.1} parent=1 // pred_fallthru
      _
    // Predicated region
    $region50: #{tpu_custom_call.1} parent=1 // pred_check
      _
    $region51: #{tpu_custom_call.1} parent=1 // pred_check_branch
      %467 = sbr.rel (0) target = $region53
    $region52: #{tpu_custom_call.1} parent=1 // pred_region
      %s469 = ssub.s32 32, 32
      %470 = vsyncadd [#allocation17], %s469
      %s472 = sshll.u32 [#allocation18], 4
      %s473 = int_to_ptr.vmem [resolvable:$true] %s472
      %475 = dma.vmem_to_hbm [thread:$0]  %s473, 32, %s10, [#allocation17]
    $region53: #{tpu_custom_call.1} parent=1 // pred_fallthru
      _
    // Predicated region
    $region54: #{tpu_custom_call.1} parent=1 // pred_check
      _
    $region55: #{tpu_custom_call.1} parent=1 // pred_check_branch
      %477 = sbr.rel (0) target = $region57
    $region56: #{tpu_custom_call.1} parent=1 // pred_region
      %478 = dma.done [#allocation9], 32
    $region57: #{tpu_custom_call.1} parent=1 // pred_fallthru
      _
    // Predicated region
    $region58: #{tpu_custom_call.1} parent=1 // pred_check
      _
    $region59: #{tpu_custom_call.1} parent=1 // pred_check_branch
      %480 = sbr.rel (0) target = $region61
    $region60: #{tpu_custom_call.1} parent=1 // pred_region
      %481 = dma.done [#allocation14], 32
    $region61: #{tpu_custom_call.1} parent=1 // pred_fallthru
      _
    // Predicated region
    $region62: #{tpu_custom_call.1} parent=1 // pred_check
      _
    $region63: #{tpu_custom_call.1} parent=1 // pred_check_branch
      %483 = sbr.rel (0) target = $region65
    $region64: #{tpu_custom_call.1} parent=1 // pred_region
      %484 = dma.done [#allocation14], 32
    $region65: #{tpu_custom_call.1} parent=1 // pred_fallthru
      _
    // Predicated region
    $region66: #{tpu_custom_call.1} parent=1 // pred_check
      _
    $region67: #{tpu_custom_call.1} parent=1 // pred_check_branch
      %486 = sbr.rel (0) target = $region69
    $region68: #{tpu_custom_call.1} parent=1 // pred_region
      %487 = dma.done [#allocation17], 32
    $region69: #{tpu_custom_call.1} parent=1 // pred_fallthru
      _
    // Predicated region
    $region70: #{tpu_custom_call.1} parent=1 // pred_check
      _
    $region71: #{tpu_custom_call.1} parent=1 // pred_check_branch
      %489 = sbr.rel (0) target = $region73
    $region72: #{tpu_custom_call.1} parent=1 // pred_region
      %490 = dma.done [#allocation17], 32
    $region73: #{tpu_custom_call.1} parent=1 // pred_fallthru
      _
    %491 = vsyncpa [#allocation8], 1
    %492 = vsyncpa [#allocation11], 1
    %493 = vsyncpa [#allocation9], 1
    %494 = vsyncpa [#allocation14], 1
    %495 = vsyncpa [#allocation17], 1
  %496 = vsyncmov [#allocation3]
  %s497 = vpop.sfrf %496
  %p498 = scmp.eq.s32.totalorder %s497, 0
  %p499 = pneg %p498
  %501 = shalt.err (%p499)
  %s502 = scalar_lea.sflag [#allocation3], 1
  %503 = vsyncmov %s502
  %s504 = vpop.sfrf %503
  %p505 = scmp.eq.s32.totalorder %s504, 0
  %p506 = pneg %p505
  %508 = shalt.err (%p506)

</llo_original>
